<compile_context>
chip_gen: v7x
topology: tpu7x:2x2x1
jax: 0.10.0
libtpu: 0.0.40
codegen_flags: <defaults>
</compile_context>

<pallas_src>
import jax
import jax.numpy as jnp
from jax.experimental import pallas as pl
from jax.experimental.pallas import tpu as pltpu


def _dma_copy_kernel(x_hbm, o_hbm, sem):
    # Single HBM -> HBM DMA of the whole array: identity copy at roofline,
    # no VMEM staging, no grid, no tiling constraints.
    cp = pltpu.make_async_copy(x_hbm, o_hbm, sem)
    cp.start()
    cp.wait()


def _resolve_shape(total, shape):
    """Resolve a single -1 (torch .view style) against the element count."""
    shape = tuple(int(s) for s in shape)
    if shape.count(-1) > 1:
        raise ValueError("only one -1 allowed in target shape")
    if -1 in shape:
        idx = shape.index(-1)
        known = 1
        for i, s in enumerate(shape):
            if i != idx:
                known *= s
        if known == 0 or total % known != 0:
            raise ValueError(f"cannot reshape {total} elements into {shape}")
        shape = shape[:idx] + (total // known,) + shape[idx + 1:]
    prod = 1
    for s in shape:
        prod *= s
    if prod != total:
        raise ValueError(f"cannot reshape {total} elements into {shape}")
    return shape


def view_or_reshape(x, *shape, materialize_copy=False):
    """Pallas equivalent of ViewOrReshape(*shape).forward(x).

    Default path is a metadata-only jnp.reshape (zero HBM traffic).  With
    materialize_copy=True the data is physically copied once via a single
    HBM->HBM DMA inside a Pallas kernel, then reshaped (metadata only).

    # TODO(synk): PyTorch's is_contiguous() view-vs-reshape branch has no JAX
    # analogue (all JAX arrays are contiguous); both branches map to this.
    """
    total = int(x.size)
    target_shape = _resolve_shape(total, shape)

    if not materialize_copy or total == 0:
        # Fast path: reshape of a contiguous array is metadata-only in XLA.
        return jnp.reshape(x, target_shape)

    itemsize = jnp.dtype(x.dtype).itemsize
    y = pl.pallas_call(
        _dma_copy_kernel,
        out_shape=jax.ShapeDtypeStruct(x.shape, x.dtype),
        in_specs=[pl.BlockSpec(memory_space=pl.ANY)],
        out_specs=pl.BlockSpec(memory_space=pl.ANY),
        scratch_shapes=[pltpu.SemaphoreType.DMA],
        cost_estimate=pl.CostEstimate(
            flops=0, transcendentals=0, bytes_accessed=2 * total * itemsize),
    )(x)
    # Metadata-only shape change of the copied result.
    return jnp.reshape(y, target_shape)


if __name__ == "__main__":
    key = jax.random.PRNGKey(0)
    k0, k1 = jax.random.split(key)

    # Small shapes consistent with the module: batch=2, channels=4, spatial=16.
    x = jax.random.normal(k0, (2, 4, 16, 16), dtype=jnp.float32)

    # Default fast path: metadata-only reshape (the biggest win per review).
    y = view_or_reshape(x, 2, -1)  # flatten per-sample -> (2, 1024)
    jax.block_until_ready(y)
    assert y.shape == (2, 1024)
    assert jnp.array_equal(y, jnp.reshape(x, (2, 1024))), "mismatch vs reference"

    # Explicit materialized copy exercises the Pallas HBM->HBM DMA kernel.
    y_copy = view_or_reshape(x, 2, -1, materialize_copy=True)
    jax.block_until_ready(y_copy)
    assert y_copy.shape == (2, 1024)
    assert y_copy.dtype == jnp.float32
    assert jnp.array_equal(y_copy, jnp.reshape(x, (2, 1024))), "mismatch vs reference"

    # bf16 preserved end-to-end through the DMA-copy path (no upcast, no pad).
    x2 = jax.random.normal(k1, (5, 8, 32, 32), dtype=jnp.bfloat16)
    y2 = view_or_reshape(x2, -1, 256, materialize_copy=True)
    jax.block_until_ready(y2)
    assert y2.shape == (160, 256)
    assert y2.dtype == jnp.bfloat16
    assert jnp.array_equal(y2, jnp.reshape(x2, (160, 256))), "mismatch vs reference"

    print("KERNEL_OK")
</pallas_src>

<mosaic_0001>
module attributes {stable_mosaic.version = 11 : i64} {
  func.func @_dma_copy_kernel(%arg0: memref<2x4x16x16xf32, #tpu.memory_space<any>>, %arg1: memref<2x4x16x16xf32, #tpu.memory_space<any>>, %arg2: memref<!tpu.dma_semaphore, #tpu.memory_space<semaphore_mem>>) attributes {dimension_semantics = [], scalar_prefetch = 0 : i64, scratch_operands = 1 : i64, tpu.core_type = #tpu.core_type<tc>} {
    tpu.enqueue_dma source(%arg0 : memref<2x4x16x16xf32, #tpu.memory_space<any>>) target(%arg1 : memref<2x4x16x16xf32, #tpu.memory_space<any>>) target_semaphore(%arg2 : memref<!tpu.dma_semaphore, #tpu.memory_space<semaphore_mem>>)
    tpu.wait_dma2 semaphore(%arg2 : memref<!tpu.dma_semaphore, #tpu.memory_space<semaphore_mem>>) src(%arg0 : memref<2x4x16x16xf32, #tpu.memory_space<any>>) dst(%arg1 : memref<2x4x16x16xf32, #tpu.memory_space<any>>)
    return
  }
}

</mosaic_0001>

<llo_original>
// kernel: tpu_custom_call.1
$region0: #{tpu_custom_call.1}
  #allocation0 [shape = 'u32[]', space=smem, size = 0x4, offset = 0x4, fixed_abs, tag = 'smem constant byte address 0x4 - core index']
  #allocation1 [shape = 'u32[144,128]{1,0:T(1,128)}', space=vmem, size = 0x12000, scoped, tag = 'internal scratch']
  #allocation2 [shape = 's32[1]{0}', space=sflag, size = 0x4, scoped, tag = 'scratch operand']
  #allocation3 [shape = 's32[]', space=sflag, size = 0x4, offset = 0, fixed_abs, tag = 'sflag constant byte address 0x0 - dummy sync flag']
  #allocation4 [shape = 'u32[0]{0}', space=smem, size = 0, offset = 0, fixed_abs, tag = 'smem constant byte address 0x0 - null']
  %s0 = inlined_call_operand.hbm [shape: f32[2,4,16,16], index: 0, kind: input, shape index: {}]
  %s1 = inlined_call_operand.hbm [shape: f32[2,4,16,16], index: 1, kind: output, shape index: {}]
  %s2 = sld [smem:[#allocation0]]
  $region2: #{tpu_custom_call.1} parent=0
    _
  %s4 = ssub.s32 1, %s2
  %s5 = scalar_select 0, %s4, %s2
  %s7 = sshll.u32 1, 14
  %s8 = sxor.u32 4294967295, %s7
  %s11 = sshll.u32 3, 24
  %s12 = sxor.u32 4294967295, %s11
  %s13 = sand.u32 0, %s12
  %s15 = sor.u32 %s13, 0
  %18 = dma.general %s0, 2048, %s1, [#allocation2], [#allocation3], [#allocation4], %s15, 0
  %s19 = smul.u32 2, 4
  %s20 = smul.u32 %s19, 16
  %s21 = smul.u32 %s20, 1
  %s22 = sshll.u32 %s21, 4
  %23 = dma.done [#allocation2], %s22
  %24 = vsyncmov [#allocation2]
  %s25 = vpop.sfrf %24
  %p26 = scmp.eq.s32.totalorder %s25, 0
  %p27 = pneg %p26
  %29 = shalt.err (%p27)

</llo_original>
